<compile_context>
chip_gen: v6e
topology: v6e:2x2x1
jax: 0.10.0
libtpu: 0.0.40
codegen_flags: <defaults>
</compile_context>

<pallas_src>
import jax
import jax.numpy as jnp
from jax.experimental import pallas as pl
from jax.experimental.pallas import tpu as pltpu


def _outconv_softmax_kernel(x_ref, w_ref, b_ref, o_ref):
    """Fused 1x1-conv + channel softmax for one (batch-block, length-tile) block.

    x_ref: (Nb, Cin, TL)   input tile
    w_ref: (NC, Cin)       conv weight (kernel_size=1 squeezed away)
    b_ref: (NC, 1)         conv bias
    o_ref: (Nb, NC, TL)    softmax(conv(x)) over the channel (sublane) axis
    """
    w = w_ref[...]
    b = b_ref[...]
    nb = x_ref.shape[0]
    for i in range(nb):  # static, tiny block count -> fully unrolled
        x = x_ref[i]                                                   # (Cin, TL)
        # Pointwise conv == one MXU matmul over the channel (contracting) dim.
        logits = jnp.dot(w, x, preferred_element_type=jnp.float32) + b  # (NC, TL)
        # Numerically-stable softmax over channels (axis 0 == sublane axis).
        m = jnp.max(logits, axis=0, keepdims=True)                     # (1, TL)
        e = jnp.exp(logits - m)
        s = jnp.sum(e, axis=0, keepdims=True)
        o_ref[i] = e * pl.reciprocal(s, approx=False)                  # EUP, exact


def _physical_vmem_bytes():
    try:
        return int(pltpu.get_tpu_info().vmem_capacity_bytes)
    except Exception:
        return 64 * 1024 * 1024  # conservative (v7x per-TensorCore)


def out_conv_forward(x, w, b, *, tile_l=None):
    """OutConv.forward.

    x: (N, Cin, L), w: (NC, Cin, 1), b: (NC,). Returns (N, NC, L) float32.
    tile_l=None -> auto-sized, VMEM-budgeted lane tile (primary tuning knob).
    """
    N, Cin, L = x.shape
    NC = w.shape[0]
    x = x.astype(jnp.float32)
    w2 = w.reshape(NC, Cin).astype(jnp.float32)
    b2 = b.reshape(NC, 1).astype(jnp.float32)
    itemsize = 4

    # ---- VMEM-aware tile sizing (v5e/v6e: 128 MiB phys, v7x: 64 MiB per TC) ----
    phys_vmem = _physical_vmem_bytes()
    vmem_limit = int(min(phys_vmem * 3 // 4, 96 * 1024 * 1024))
    tile_budget = vmem_limit // 2  # headroom for pipeline bookkeeping / weights

    # Per lane, per batch-row cost of a double-buffered (x, out) tile pair.
    lane_cost = 2 * (Cin + NC) * itemsize
    # Largest 128-multiple lane tile fitting the budget at Nb=1, capped at 32K
    # lanes (beyond that the ~0.35 us/step overhead is already fully amortized).
    tl_cap = max(128, min((tile_budget // lane_cost) // 128 * 128, 32768))

    if tile_l is None:
        tl = tl_cap
    else:
        # Guard bad caller values: keep a lane-dense, VMEM-feasible tile (>=128).
        tl = max(128, (min(int(tile_l), tl_cap) // 128) * 128)

    if L <= tl:
        tl = L            # one full-length tile; block dim == full array dim,
        n_tiles = 1       # so the (8,128) lane constraint is satisfied for any L.
    else:
        n_tiles = pl.cdiv(L, tl)  # ragged tail handled by Pallas masked boundary block

    # ---- Batch blocking: amortize per-step overhead when L alone is short -----
    if n_tiles == 1:
        target_bytes = 4 << 20  # aim for ~4 MiB of input per grid step
        nb = max(1, min(N, target_bytes // max(Cin * tl * itemsize, 1)))
        if N >= 2:
            nb = min(nb, pl.cdiv(N, 2))  # keep >=2 parallel steps for v7x's 2 TCs
        nb = max(1, min(nb, max(1, tile_budget // max(tl * lane_cost, 1))))
    else:
        nb = 1
    n_batch_blocks = pl.cdiv(N, nb)

    out = pl.pallas_call(
        _outconv_softmax_kernel,
        out_shape=jax.ShapeDtypeStruct((N, NC, L), jnp.float32),
        grid=(n_batch_blocks, n_tiles),
        in_specs=[
            pl.BlockSpec((nb, Cin, tl), lambda bi, li: (bi, 0, li)),  # x tile
            pl.BlockSpec((NC, Cin), lambda bi, li: (0, 0)),           # weight (resident)
            pl.BlockSpec((NC, 1), lambda bi, li: (0, 0)),             # bias (resident)
        ],
        out_specs=pl.BlockSpec((nb, NC, tl), lambda bi, li: (bi, 0, li)),
        compiler_params=pltpu.CompilerParams(
            dimension_semantics=("parallel", "parallel"),
            vmem_limit_bytes=vmem_limit),
    )(x, w2, b2)
    return out


# ---------------- pure-JAX reference (independent formulation) ----------------
def _ref_forward(x, w, b):
    logits = jnp.einsum("oc,ncl->nol", w.reshape(w.shape[0], w.shape[1]), x)
    logits = logits + b[None, :, None]
    return jax.nn.softmax(logits, axis=1)


if __name__ == "__main__":
    key = jax.random.PRNGKey(0)
    # OutConv(in_channels=20, n_classes=5) on a (2, 20, 1024) input.
    N, Cin, NC, L = 2, 20, 5, 1024
    k0, k1, k2 = jax.random.split(key, 3)

    x = jax.random.normal(k0, (N, Cin, L), jnp.float32)
    # PyTorch Conv1d(k=1) weight layout: (n_classes, in_channels, 1), bias: (n_classes,)
    w = 0.3 * jax.random.normal(k1, (NC, Cin, 1), jnp.float32)
    b = 0.1 * jax.random.normal(k2, (NC,), jnp.float32)

    out = jax.block_until_ready(out_conv_forward(x, w, b))
    ref = jax.block_until_ready(_ref_forward(x, w, b))
    assert out.shape == (N, NC, L), out.shape
    err = float(jnp.max(jnp.abs(out - ref)))
    assert jnp.allclose(out, ref, atol=1e-5, rtol=1e-5), f"max abs err {err}"
    colsum_err = float(jnp.max(jnp.abs(jnp.sum(out, axis=1) - 1.0)))
    assert colsum_err < 1e-5, colsum_err

    # Ragged-length path: L not a multiple of the forced tile -> exercises the
    # masked boundary block (no pad / slice copies anywhere).
    L2 = 1000
    x2 = jax.random.normal(k0, (N, Cin, L2), jnp.float32)
    out2 = jax.block_until_ready(out_conv_forward(x2, w, b, tile_l=256))
    ref2 = jax.block_until_ready(_ref_forward(x2, w, b))
    assert out2.shape == (N, NC, L2), out2.shape
    err2 = float(jnp.max(jnp.abs(out2 - ref2)))
    assert jnp.allclose(out2, ref2, atol=1e-5, rtol=1e-5), f"max abs err {err2}"

    print("KERNEL_OK")
</pallas_src>

<mosaic_0001>
module attributes {stable_mosaic.version = 11 : i64} {
  func.func @_outconv_softmax_kernel(%arg0: i32, %arg1: i32, %arg2: memref<1x20x1024xf32, #tpu.memory_space<vmem>>, %arg3: memref<5x20xf32, #tpu.memory_space<vmem>>, %arg4: memref<5x1xf32, #tpu.memory_space<vmem>>, %arg5: memref<1x5x1024xf32, #tpu.memory_space<vmem>>) attributes {dimension_semantics = [#tpu.dimension_semantics<parallel>, #tpu.dimension_semantics<parallel>], iteration_bounds = array<i64: 2, 1>, scalar_prefetch = 0 : i64, scratch_operands = 0 : i64, tpu.core_type = #tpu.core_type<tc>, window_params = [{transform_indices = @transform_0, window_bounds = array<i64: 1, 20, 1024>}, {pipeline_mode = #tpu.pipeline_mode<synchronous>, transform_indices = @transform_1, window_bounds = array<i64: 5, 20>}, {pipeline_mode = #tpu.pipeline_mode<synchronous>, transform_indices = @transform_2, window_bounds = array<i64: 5, 1>}, {transform_indices = @transform_3, window_bounds = array<i64: 1, 5, 1024>}]} {
    %c0 = arith.constant 0 : index
    %c0_0 = arith.constant 0 : index
    %0 = vector.load %arg3[%c0, %c0_0] : memref<5x20xf32, #tpu.memory_space<vmem>>, vector<5x20xf32>
    %c0_1 = arith.constant 0 : index
    %c0_2 = arith.constant 0 : index
    %1 = vector.load %arg4[%c0_1, %c0_2] : memref<5x1xf32, #tpu.memory_space<vmem>>, vector<5x1xf32>
    %c0_3 = arith.constant 0 : index
    %c0_4 = arith.constant 0 : index
    %c0_5 = arith.constant 0 : index
    %2 = vector.load %arg2[%c0_3, %c0_4, %c0_5] : memref<1x20x1024xf32, #tpu.memory_space<vmem>>, vector<1x20x1024xf32>
    %3 = vector.shape_cast %2 : vector<1x20x1024xf32> to vector<20x1024xf32>
    %cst = arith.constant dense<0.000000e+00> : vector<5x1024xf32>
    %4 = tpu.matmul %0, %3, %cst {dimension_numbers = #tpu.dot_dimension_numbers<[1], [0], [0], [1], [0, 0, 1, 1], [], []>} : vector<5x20xf32>, vector<20x1024xf32>, vector<5x1024xf32> -> vector<5x1024xf32>
    %5 = vector.broadcast %1 : vector<5x1xf32> to vector<5x1024xf32>
    %6 = arith.addf %4, %5 : vector<5x1024xf32>
    %cst_6 = arith.constant dense<0xFF800000> : vector<1024xf32>
    %7 = vector.multi_reduction <maximumf>, %6, %cst_6 [0] : vector<5x1024xf32> to vector<1024xf32>
    %8 = vector.shape_cast %7 : vector<1024xf32> to vector<1x1024xf32>
    %9 = vector.broadcast %8 : vector<1x1024xf32> to vector<5x1024xf32>
    %10 = arith.subf %6, %9 : vector<5x1024xf32>
    %11 = math.exp %10 : vector<5x1024xf32>
    %cst_7 = arith.constant dense<0.000000e+00> : vector<1024xf32>
    %12 = vector.multi_reduction <add>, %11, %cst_7 [0] : vector<5x1024xf32> to vector<1024xf32>
    %13 = vector.shape_cast %12 : vector<1024xf32> to vector<1x1024xf32>
    %14 = tpu.reciprocal %13 : vector<1x1024xf32> -> vector<1x1024xf32>
    %15 = vector.broadcast %14 : vector<1x1024xf32> to vector<5x1024xf32>
    %16 = arith.mulf %11, %15 : vector<5x1024xf32>
    %c0_8 = arith.constant 0 : index
    %c0_9 = arith.constant 0 : index
    %c0_10 = arith.constant 0 : index
    %17 = vector.load %arg5[%c0_8, %c0_9, %c0_10] : memref<1x5x1024xf32, #tpu.memory_space<vmem>>, vector<1x5x1024xf32>
    %18 = vector.shape_cast %17 : vector<1x5x1024xf32> to vector<5x1024xf32>
    %19 = vector.shape_cast %16 : vector<5x1024xf32> to vector<1x5x1024xf32>
    tpu.vector_store %arg5[%c0_8, %c0_9, %c0_10], %19 {strides = array<i32>} : memref<1x5x1024xf32, #tpu.memory_space<vmem>>, vector<1x5x1024xf32>,
    return
  }
  func.func @transform_0(%arg0: i32, %arg1: i32) -> (i32, i32, i32) {
    %c0_i32 = arith.constant 0 : i32
    %c0_i32_0 = arith.constant 0 : i32
    return %arg0, %c0_i32, %arg1 : i32, i32, i32
  }
  func.func @transform_1(%arg0: i32, %arg1: i32) -> (i32, i32) {
    %c0_i32 = arith.constant 0 : i32
    %c0_i32_0 = arith.constant 0 : i32
    %c0_i32_1 = arith.constant 0 : i32
    return %c0_i32, %c0_i32_0 : i32, i32
  }
  func.func @transform_2(%arg0: i32, %arg1: i32) -> (i32, i32) {
    %c0_i32 = arith.constant 0 : i32
    %c0_i32_0 = arith.constant 0 : i32
    %c0_i32_1 = arith.constant 0 : i32
    return %c0_i32, %c0_i32_0 : i32, i32
  }
  func.func @transform_3(%arg0: i32, %arg1: i32) -> (i32, i32, i32) {
    %c0_i32 = arith.constant 0 : i32
    %c0_i32_0 = arith.constant 0 : i32
    return %arg0, %c0_i32, %arg1 : i32, i32, i32
  }
}

</mosaic_0001>

<llo_original>
// kernel: tpu_custom_call.1
$region0: #{tpu_custom_call.1}
  #allocation0 [shape = 'u32[]', space=smem, size = 0x4, offset = 0x4, fixed_abs, tag = 'smem constant byte address 0x4 - core index']
  #allocation1 [shape = 'u32[144,128]{1,0:T(1,128)}', space=vmem, size = 0x12000, scoped, tag = 'internal scratch']
  %s0 = inlined_call_operand.vmem [shape: f32[2,20,1024], index: 0, kind: input, shape index: {}]
  %s1 = inlined_call_operand.vmem [shape: f32[5,20], index: 1, kind: input, shape index: {}]
  %s2 = inlined_call_operand.vmem [shape: f32[5,1], index: 2, kind: input, shape index: {}]
  %s3 = inlined_call_operand.vmem [shape: f32[2,5,1024], index: 3, kind: output, shape index: {}]
  %s4 = sld [smem:[#allocation0]]
  $region45: #{tpu_custom_call.1} parent=0
    _
  %s6 = ssub.s32 1, %s4
  %s7 = scalar_select 0, %s6, %s4
  loop: start=0, step=1, limit=4
  $region2: #{tpu_custom_call.1} parent=0 // loop_pre_header
    _
  $region3: #{tpu_custom_call.1} parent=0 // loop_header
    %s9 = sphi 0, %s13
    %p10 = scmp.ge.s32.totalorder %s9, 4
    %s16 = sphi 0, %s28
    %s17 = sphi 0, %s24
    %s18 = sphi 0, %s16
    %s19 = sphi 0, %s17
    %s20 = sphi 0, %s18
    %s21 = sphi 0, %s19
    %s33 = sphi 0, %s35
    %s36 = sphi 0, %s33
    %s37 = sphi 0, %s36
    %s53 = sphi 0, %s37
    %s57 = sphi 0, %s57
    %s59 = sphi 0, %s57
    %s60 = sphi 0, %s59
    %s74 = sphi 0, %s60
    %s78 = sphi 0, %s78
    %s80 = sphi 0, %s78
    %s81 = sphi 0, %s80
    %s95 = sphi 0, %s81
    %s103 = sphi 0, %s105
    %s106 = sphi 0, %s103
    %s107 = sphi 0, %s106
    %s123 = sphi 0, %s107
  $region4: #{tpu_custom_call.1} parent=0 // loop_header_branch
    %12 = sbr.rel (%p10) target = $region8
  $region5: #{tpu_custom_call.1} parent=0 // loop_body
    %s14 = ssub.s32 %s9, 1
    %s15 = ssub.s32 %s9, 2
    %s22 = sadd.s32 1, %s17
    %p23 = scmp.ge.s32.totalorder %s22, 1
    %s24 = scalar_select %p23, 0, %s22
    %s25 = sadd.s32 1, %s16
    %s26 = scalar_select %p23, %s25, %s16
    %p27 = scmp.ge.s32.totalorder %s26, 2
    %s28 = scalar_select %p27, 0, %s26
    %s29 = ssub.s32 %s16, %s28
    %s30 = ssub.s32 %s17, %s24
    %s31 = sor.u32 %s29, %s30
    %p32 = scmp.eq.s32.totalorder %s31, 0
    %s34 = sadd.s32 %s33, 1
    %s35 = scalar_select %p32, %s33, %s34
    %p38 = pneg %p32
    %p39 = scmp.eq.s32.totalorder %s9, 1
    %p40 = por %p38, %p39
    %p41 = scmp.ne.s32.totalorder %s33, %s36
    %p42 = scmp.eq.s32.totalorder %s9, 0
    %p43 = por %p41, %p42
    %p44 = scmp.ne.s32.totalorder %s33, %s36
    %p45 = scmp.eq.s32.totalorder %s14, 1
    %p46 = por %p44, %p45
    %p47 = scmp.ne.s32.totalorder %s36, %s37
    %p48 = scmp.eq.s32.totalorder %s14, 0
    %p49 = por %p47, %p48
    %p50 = scmp.ne.s32.totalorder %s36, %s37
    %p51 = scmp.eq.s32.totalorder %s15, 1
    %p52 = por %p50, %p51
    %p54 = scmp.ne.s32.totalorder %s37, %s53
    %p55 = scmp.eq.s32.totalorder %s15, 0
    %p56 = por %p54, %p55
    %s58 = sadd.s32 %s57, 1
    %p61 = scmp.eq.s32.totalorder %s9, 1
    %p62 = scmp.ne.s32.totalorder %s57, %s59
    %p63 = scmp.eq.s32.totalorder %s9, 0
    %p64 = por %p62, %p63
    %p65 = scmp.ne.s32.totalorder %s57, %s59
    %p66 = scmp.eq.s32.totalorder %s14, 1
    %p67 = por %p65, %p66
    %p68 = scmp.ne.s32.totalorder %s59, %s60
    %p69 = scmp.eq.s32.totalorder %s14, 0
    %p70 = por %p68, %p69
    %p71 = scmp.ne.s32.totalorder %s59, %s60
    %p72 = scmp.eq.s32.totalorder %s15, 1
    %p73 = por %p71, %p72
    %p75 = scmp.ne.s32.totalorder %s60, %s74
    %p76 = scmp.eq.s32.totalorder %s15, 0
    %p77 = por %p75, %p76
    %s79 = sadd.s32 %s78, 1
    %p82 = scmp.eq.s32.totalorder %s9, 1
    %p83 = scmp.ne.s32.totalorder %s78, %s80
    %p84 = scmp.eq.s32.totalorder %s9, 0
    %p85 = por %p83, %p84
    %p86 = scmp.ne.s32.totalorder %s78, %s80
    %p87 = scmp.eq.s32.totalorder %s14, 1
    %p88 = por %p86, %p87
    %p89 = scmp.ne.s32.totalorder %s80, %s81
    %p90 = scmp.eq.s32.totalorder %s14, 0
    %p91 = por %p89, %p90
    %p92 = scmp.ne.s32.totalorder %s80, %s81
    %p93 = scmp.eq.s32.totalorder %s15, 1
    %p94 = por %p92, %p93
    %p96 = scmp.ne.s32.totalorder %s81, %s95
    %p97 = scmp.eq.s32.totalorder %s15, 0
    %p98 = por %p96, %p97
    %s99 = ssub.s32 %s16, %s28
    %s100 = ssub.s32 %s17, %s24
    %s101 = sor.u32 %s99, %s100
    %p102 = scmp.eq.s32.totalorder %s101, 0
    %s104 = sadd.s32 %s103, 1
    %s105 = scalar_select %p102, %s103, %s104
    %p108 = pneg %p102
    %p109 = scmp.eq.s32.totalorder %s9, 1
    %p110 = por %p108, %p109
    %p111 = scmp.ne.s32.totalorder %s103, %s106
    %p112 = scmp.eq.s32.totalorder %s9, 0
    %p113 = por %p111, %p112
    %p114 = scmp.ne.s32.totalorder %s103, %s106
    %p115 = scmp.eq.s32.totalorder %s14, 1
    %p116 = por %p114, %p115
    %p117 = scmp.ne.s32.totalorder %s106, %s107
    %p118 = scmp.eq.s32.totalorder %s14, 0
    %p119 = por %p117, %p118
    %p120 = scmp.ne.s32.totalorder %s106, %s107
    %p121 = scmp.eq.s32.totalorder %s15, 1
    %p122 = por %p120, %p121
    %p124 = scmp.ne.s32.totalorder %s107, %s123
    %p125 = scmp.eq.s32.totalorder %s15, 0
    %p126 = por %p124, %p125
    %p127 = scmp.le.s32.totalorder 1, %s9
    %p128 = scmp.lt.s32.totalorder %s9, 3
    %p129 = pnand %p127, %p128
    %p130 = pneg %p129
    // Predicated region
    $region9: #{tpu_custom_call.1} parent=5 // pred_check
      _
    $region10: #{tpu_custom_call.1} parent=5 // pred_check_branch
      %132 = sbr.rel (%p129) target = $region12
    $region11: #{tpu_custom_call.1} parent=5 // pred_region
      %s133 = ssub.s32 %s9, 1
      // Predicated region
      $region13: #{tpu_custom_call.1} parent=11 // pred_check
        %p134 = pneg %p70
      $region14: #{tpu_custom_call.1} parent=11 // pred_check_branch
        %136 = sbr.rel (%p134) target = $region16
      $region15: #{tpu_custom_call.1} parent=11 // pred_region
        _
      $region16: #{tpu_custom_call.1} parent=11 // pred_fallthru
        _
      // Predicated region
      $region17: #{tpu_custom_call.1} parent=11 // pred_check
        %p137 = pneg %p91
      $region18: #{tpu_custom_call.1} parent=11 // pred_check_branch
        %139 = sbr.rel (%p137) target = $region20
      $region19: #{tpu_custom_call.1} parent=11 // pred_region
        _
      $region20: #{tpu_custom_call.1} parent=11 // pred_fallthru
        _
    $region12: #{tpu_custom_call.1} parent=5 // pred_fallthru
      _
    %p140 = scmp.lt.s32.totalorder %s9, 2
    // Predicated region
    $region21: #{tpu_custom_call.1} parent=5 // pred_check
      %p141 = pneg %p140
    $region22: #{tpu_custom_call.1} parent=5 // pred_check_branch
      %143 = sbr.rel (%p141) target = $region24
    $region23: #{tpu_custom_call.1} parent=5 // pred_region
      // Predicated region
      $region25: #{tpu_custom_call.1} parent=23 // pred_check
        %p144 = pneg %p43
      $region26: #{tpu_custom_call.1} parent=23 // pred_check_branch
        %146 = sbr.rel (%p144) target = $region28
      $region27: #{tpu_custom_call.1} parent=23 // pred_region
        %s147 = smul.u32 8, %s17
        %p148 = scmp.lt.s32.totalorder %s16, 1
        %s149 = scalar_select %p148, %s16, 1
        %p150 = scmp.lt.s32.totalorder %s147, 7
        %s151 = scalar_select %p150, %s147, 7
        %s152 = smul.addr %s149, 24
        %s153 = sadd.s32 %s151, %s152
        %s154 = smul.addr %s153, 8
        %s155 = scalar_lea.vmem %s0, %s154
        %s156 = smul.u32 8, %s17
      $region28: #{tpu_custom_call.1} parent=23 // pred_fallthru
        _
    $region24: #{tpu_custom_call.1} parent=5 // pred_fallthru
      _
    %p157 = scmp.le.s32.totalorder 1, %s9
    %p158 = scmp.lt.s32.totalorder %s9, 3
    %p159 = pnand %p157, %p158
    %p160 = pneg %p159
    // Predicated region
    $region29: #{tpu_custom_call.1} parent=5 // pred_check
      _
    $region30: #{tpu_custom_call.1} parent=5 // pred_check_branch
      %162 = sbr.rel (%p159) target = $region32
    $region31: #{tpu_custom_call.1} parent=5 // pred_region
      %s163 = ssub.s32 %s9, 1
      %s164 = smul.u32 8, %s19
      %p165 = scmp.lt.s32.totalorder %s18, 1
      %s166 = scalar_select %p165, %s18, 1
      %p167 = scmp.lt.s32.totalorder %s164, 7
      %s168 = scalar_select %p167, %s164, 7
      %s169 = smul.addr %s166, 24
      %s170 = sadd.s32 %s168, %s169
      %s171 = smul.addr %s170, 8
      %s172 = scalar_lea.vmem %s0, %s171
      %p173 = pneg %p49
      %p174 = pneg %p46
      %p175 = pneg %p70
      %p176 = pneg %p67
      %p177 = pneg %p91
      %p178 = pneg %p88
      %p179 = pneg %p119
      %p180 = pneg %p116
      %s181 = smul.u32 8, %s19
      %p182 = scmp.lt.s32.totalorder %s18, 1
      %s183 = scalar_select %p182, %s18, 1
      %p184 = scmp.lt.s32.totalorder %s181, 7
      %s185 = scalar_select %p184, %s181, 7
      %s186 = smul.addr %s183, 8
      %s187 = sadd.s32 %s185, %s186
      %s188 = smul.addr %s187, 8
      %s189 = scalar_lea.vmem %s3, %s188
      %s190 = smul.u32 8, %s19
      %p191 = scmp.lt.s32.totalorder %s18, 1
      %s192 = scalar_select %p191, %s18, 1
      %p193 = scmp.lt.s32.totalorder %s190, 7
      %s194 = scalar_select %p193, %s190, 7
      %s195 = smul.addr %s192, 24
      %s196 = sadd.s32 %s194, %s195
      %s197 = smul.addr %s196, 8
      %s198 = scalar_lea.vmem %s0, %s197
      %s199 = smul.u32 8, %s19
      %s200 = smul.u32 8, %s19
      %p201 = scmp.lt.s32.totalorder %s18, 1
      %s202 = scalar_select %p201, %s18, 1
      %p203 = scmp.lt.s32.totalorder %s200, 7
      %s204 = scalar_select %p203, %s200, 7
      %s205 = smul.addr %s202, 8
      %s206 = sadd.s32 %s204, %s205
      %s207 = smul.addr %s206, 8
      %s208 = scalar_lea.vmem %s3, %s207
      %s209 = smul.u32 8, %s19
      %v210 = vld [vmem:[%s1] sm:$0x1f]
      %v211 = vld [vmem:[%s2] sm:$0x1f]
      %v212 = vld [vmem:[%s198] sm:$0xff]
      %v213 = vld [vmem:[%s198 + $0x8] sm:$0xff]
      %v214 = vld [vmem:[%s198 + $0x10] sm:$0xff]
      %v215 = vld [vmem:[%s198 + $0x18] sm:$0xff]
      %v216 = vld [vmem:[%s198 + $0x20] sm:$0xff]
      %v217 = vld [vmem:[%s198 + $0x28] sm:$0xff]
      %v218 = vld [vmem:[%s198 + $0x30] sm:$0xff]
      %v219 = vld [vmem:[%s198 + $0x38] sm:$0xff]
      %v220 = vld [vmem:[%s198 + $0x40] sm:$0xff]
      %v221 = vld [vmem:[%s198 + $0x48] sm:$0xff]
      %v222 = vld [vmem:[%s198 + $0x50] sm:$0xff]
      %v223 = vld [vmem:[%s198 + $0x58] sm:$0xff]
      %v224 = vld [vmem:[%s198 + $0x60] sm:$0xff]
      %v225 = vld [vmem:[%s198 + $0x68] sm:$0xff]
      %v226 = vld [vmem:[%s198 + $0x70] sm:$0xff]
      %v227 = vld [vmem:[%s198 + $0x78] sm:$0xff]
      %v228 = vld [vmem:[%s198 + $0x80] sm:$0xf]
      %v229 = vld [vmem:[%s198 + $0x88] sm:$0xf]
      %v230 = vld [vmem:[%s198 + $0x90] sm:$0xf]
      %v231 = vld [vmem:[%s198 + $0x98] sm:$0xf]
      %v232 = vld [vmem:[%s198 + $0xa0] sm:$0xf]
      %v233 = vld [vmem:[%s198 + $0xa8] sm:$0xf]
      %v234 = vld [vmem:[%s198 + $0xb0] sm:$0xf]
      %v235 = vld [vmem:[%s198 + $0xb8] sm:$0xf]
      %237 = vset.pattern.permute.xlu0 0
      %238 = vperm.xlu0 %237, %v211
      %v239 = vpop.permute.xlu0 %238
      %vm241 = vcmask 162816
      %v243 = vsel %vm241, %v210, 0
      %vm245 = vcmask 1043456
      %v247 = vsel %vm245, %v228, 0
      %v250 = vsel %vm245, %v229, 0
      %v253 = vsel %vm245, %v230, 0
      %v256 = vsel %vm245, %v231, 0
      %v259 = vsel %vm245, %v232, 0
      %v262 = vsel %vm245, %v233, 0
      %v265 = vsel %vm245, %v234, 0
      %v268 = vsel %vm245, %v235, 0
      %270 = vmatprep.subr.mxu0 0.0
      %271 = vmatpush1.msra.mxu0 0.0
      %272 = vmatprep.subr.mxu0 0.0
      %273 = vmatpush1.msra.mxu0 0.0
      %274 = vmatprep.subr.mxu0 0.0
      %275 = vmatpush1.msra.mxu0 0.0
      %276 = vmatprep.subr.mxu0 0.0
      %277 = vmatpush1.msra.mxu0 0.0
      %278 = vmatprep.subr.mxu0 0.0
      %279 = vmatpush1.msra.mxu0 0.0
      %280 = vmatprep.subr.mxu0 0.0
      %281 = vmatpush1.msra.mxu0 0.0
      %282 = vmatprep.subr.mxu0 0.0
      %283 = vmatpush1.msra.mxu0 0.0
      %284 = vmatprep.subr.mxu0 0.0
      %285 = vmatpush1.msra.mxu0 0.0
      %286 = vmatprep.subr.mxu0 0.0
      %287 = vmatpush1.msra.mxu0 0.0
      %288 = vmatprep.subr.mxu0 0.0
      %289 = vmatpush1.msra.mxu0 0.0
      %290 = vmatprep.subr.mxu0 0.0
      %291 = vmatpush1.msra.mxu0 0.0
      %292 = vmatprep.subr.mxu0 0.0
      %293 = vmatpush1.msra.mxu0 0.0
      %294 = vmatprep.subr.mxu0 0.0
      %295 = vmatpush1.msra.mxu0 0.0
      %296 = vmatprep.subr.mxu0 %v250
      %297 = vmatpush1.msra.mxu0 %v247
      %298 = vmatprep.subr.mxu0 %v221
      %299 = vmatpush1.msra.mxu0 %v220
      %300 = vmatprep.subr.mxu0 %v213
      %301 = vmatpush1.msra.mxu0 %v212
      %302 = vmatprep.subr.mxu0 0.0
      %303 = vmatpush2.msra.mxu0 0.0
      %304 = vmatprep.subr.mxu0 0.0
      %305 = vmatpush2.msra.mxu0 0.0
      %306 = vmatprep.subr.mxu0 0.0
      %307 = vmatpush2.msra.mxu0 0.0
      %308 = vmatprep.subr.mxu0 0.0
      %309 = vmatpush2.msra.mxu0 0.0
      %310 = vmatprep.subr.mxu0 0.0
      %311 = vmatpush2.msra.mxu0 0.0
      %312 = vmatprep.subr.mxu0 0.0
      %313 = vmatpush2.msra.mxu0 0.0
      %314 = vmatprep.subr.mxu0 0.0
      %315 = vmatpush2.msra.mxu0 0.0
      %316 = vmatprep.subr.mxu0 0.0
      %317 = vmatpush2.msra.mxu0 0.0
      %318 = vmatprep.subr.mxu0 0.0
      %319 = vmatpush2.msra.mxu0 0.0
      %320 = vmatprep.subr.mxu0 0.0
      %321 = vmatpush2.msra.mxu0 0.0
      %322 = vmatprep.subr.mxu0 0.0
      %323 = vmatpush2.msra.mxu0 0.0
      %324 = vmatprep.subr.mxu0 0.0
      %325 = vmatpush2.msra.mxu0 0.0
      %326 = vmatprep.subr.mxu0 0.0
      %327 = vmatpush2.msra.mxu0 0.0
      %328 = vmatprep.subr.mxu0 0.0
      %329 = vmatpush2.msra.mxu0 0.0
      %330 = vmatprep.subr.mxu0 0.0
      %331 = vmatpush2.msra.mxu0 0.0
      %332 = vmatprep.subr.mxu0 0.0
      %333 = vmatpush2.msra.mxu0 0.0
      %334 = vmatprep.mubr.f32.mxu0 0.0
      %335 = vmatmul.mubr.f32.gmra.mxu0 %v243
      %v336 = vpop.f32.mrf.mxu0
      %v337 = vadd.f32 %v239, %v336
      %v338 = vpop.f32.mrf.mxu0
      %v339 = vadd.f32 %v239, %v338
      %340 = vdwg.mxu0
      %341 = vmatprep.subr.mxu0 0.0
      %342 = vmatpush1.msra.mxu0 0.0
      %343 = vmatprep.subr.mxu0 0.0
      %344 = vmatpush1.msra.mxu0 0.0
      %345 = vmatprep.subr.mxu0 0.0
      %346 = vmatpush1.msra.mxu0 0.0
      %347 = vmatprep.subr.mxu0 0.0
      %348 = vmatpush1.msra.mxu0 0.0
      %349 = vmatprep.subr.mxu0 0.0
      %350 = vmatpush1.msra.mxu0 0.0
      %351 = vmatprep.subr.mxu0 0.0
      %352 = vmatpush1.msra.mxu0 0.0
      %353 = vmatprep.subr.mxu0 0.0
      %354 = vmatpush1.msra.mxu0 0.0
      %355 = vmatprep.subr.mxu0 0.0
      %356 = vmatpush1.msra.mxu0 0.0
      %357 = vmatprep.subr.mxu0 0.0
      %358 = vmatpush1.msra.mxu0 0.0
      %359 = vmatprep.subr.mxu0 0.0
      %360 = vmatpush1.msra.mxu0 0.0
      %361 = vmatprep.subr.mxu0 0.0
      %362 = vmatpush1.msra.mxu0 0.0
      %363 = vmatprep.subr.mxu0 0.0
      %364 = vmatpush1.msra.mxu0 0.0
      %365 = vmatprep.subr.mxu0 0.0
      %366 = vmatpush1.msra.mxu0 0.0
      %367 = vmatprep.subr.mxu0 %v256
      %368 = vmatpush1.msra.mxu0 %v253
      %369 = vmatprep.subr.mxu0 %v223
      %370 = vmatpush1.msra.mxu0 %v222
      %371 = vmatprep.subr.mxu0 %v215
      %372 = vmatpush1.msra.mxu0 %v214
      %373 = vmatprep.subr.mxu0 0.0
      %374 = vmatpush2.msra.mxu0 0.0
      %375 = vmatprep.subr.mxu0 0.0
      %376 = vmatpush2.msra.mxu0 0.0
      %377 = vmatprep.subr.mxu0 0.0
      %378 = vmatpush2.msra.mxu0 0.0
      %379 = vmatprep.subr.mxu0 0.0
      %380 = vmatpush2.msra.mxu0 0.0
      %381 = vmatprep.subr.mxu0 0.0
      %382 = vmatpush2.msra.mxu0 0.0
      %383 = vmatprep.subr.mxu0 0.0
      %384 = vmatpush2.msra.mxu0 0.0
      %385 = vmatprep.subr.mxu0 0.0
      %386 = vmatpush2.msra.mxu0 0.0
      %387 = vmatprep.subr.mxu0 0.0
      %388 = vmatpush2.msra.mxu0 0.0
      %389 = vmatprep.subr.mxu0 0.0
      %390 = vmatpush2.msra.mxu0 0.0
      %391 = vmatprep.subr.mxu0 0.0
      %392 = vmatpush2.msra.mxu0 0.0
      %393 = vmatprep.subr.mxu0 0.0
      %394 = vmatpush2.msra.mxu0 0.0
      %395 = vmatprep.subr.mxu0 0.0
      %396 = vmatpush2.msra.mxu0 0.0
      %397 = vmatprep.subr.mxu0 0.0
      %398 = vmatpush2.msra.mxu0 0.0
      %399 = vmatprep.subr.mxu0 0.0
      %400 = vmatpush2.msra.mxu0 0.0
      %401 = vmatprep.subr.mxu0 0.0
      %402 = vmatpush2.msra.mxu0 0.0
      %403 = vmatprep.subr.mxu0 0.0
      %404 = vmatpush2.msra.mxu0 0.0
      %405 = vmatprep.mubr.f32.mxu0 0.0
      %406 = vmatmul.mubr.f32.gmra.mxu0 %v243
      %v407 = vpop.f32.mrf.mxu0
      %v408 = vadd.f32 %v239, %v407
      %v409 = vpop.f32.mrf.mxu0
      %v410 = vadd.f32 %v239, %v409
      %411 = vdwg.mxu0
      %412 = vmatprep.subr.mxu0 0.0
      %413 = vmatpush1.msra.mxu0 0.0
      %414 = vmatprep.subr.mxu0 0.0
      %415 = vmatpush1.msra.mxu0 0.0
      %416 = vmatprep.subr.mxu0 0.0
      %417 = vmatpush1.msra.mxu0 0.0
      %418 = vmatprep.subr.mxu0 0.0
      %419 = vmatpush1.msra.mxu0 0.0
      %420 = vmatprep.subr.mxu0 0.0
      %421 = vmatpush1.msra.mxu0 0.0
      %422 = vmatprep.subr.mxu0 0.0
      %423 = vmatpush1.msra.mxu0 0.0
      %424 = vmatprep.subr.mxu0 0.0
      %425 = vmatpush1.msra.mxu0 0.0
      %426 = vmatprep.subr.mxu0 0.0
      %427 = vmatpush1.msra.mxu0 0.0
      %428 = vmatprep.subr.mxu0 0.0
      %429 = vmatpush1.msra.mxu0 0.0
      %430 = vmatprep.subr.mxu0 0.0
      %431 = vmatpush1.msra.mxu0 0.0
      %432 = vmatprep.subr.mxu0 0.0
      %433 = vmatpush1.msra.mxu0 0.0
      %434 = vmatprep.subr.mxu0 0.0
      %435 = vmatpush1.msra.mxu0 0.0
      %436 = vmatprep.subr.mxu0 0.0
      %437 = vmatpush1.msra.mxu0 0.0
      %438 = vmatprep.subr.mxu0 %v262
      %439 = vmatpush1.msra.mxu0 %v259
      %440 = vmatprep.subr.mxu0 %v225
      %441 = vmatpush1.msra.mxu0 %v224
      %442 = vmatprep.subr.mxu0 %v217
      %443 = vmatpush1.msra.mxu0 %v216
      %444 = vmatprep.subr.mxu0 0.0
      %445 = vmatpush2.msra.mxu0 0.0
      %446 = vmatprep.subr.mxu0 0.0
      %447 = vmatpush2.msra.mxu0 0.0
      %448 = vmatprep.subr.mxu0 0.0
      %449 = vmatpush2.msra.mxu0 0.0
      %450 = vmatprep.subr.mxu0 0.0
      %451 = vmatpush2.msra.mxu0 0.0
      %452 = vmatprep.subr.mxu0 0.0
      %453 = vmatpush2.msra.mxu0 0.0
      %454 = vmatprep.subr.mxu0 0.0
      %455 = vmatpush2.msra.mxu0 0.0
      %456 = vmatprep.subr.mxu0 0.0
      %457 = vmatpush2.msra.mxu0 0.0
      %458 = vmatprep.subr.mxu0 0.0
      %459 = vmatpush2.msra.mxu0 0.0
      %460 = vmatprep.subr.mxu0 0.0
      %461 = vmatpush2.msra.mxu0 0.0
      %462 = vmatprep.subr.mxu0 0.0
      %463 = vmatpush2.msra.mxu0 0.0
      %464 = vmatprep.subr.mxu0 0.0
      %465 = vmatpush2.msra.mxu0 0.0
      %466 = vmatprep.subr.mxu0 0.0
      %467 = vmatpush2.msra.mxu0 0.0
      %468 = vmatprep.subr.mxu0 0.0
      %469 = vmatpush2.msra.mxu0 0.0
      %470 = vmatprep.subr.mxu0 0.0
      %471 = vmatpush2.msra.mxu0 0.0
      %472 = vmatprep.subr.mxu0 0.0
      %473 = vmatpush2.msra.mxu0 0.0
      %474 = vmatprep.subr.mxu0 0.0
      %475 = vmatpush2.msra.mxu0 0.0
      %476 = vmatprep.mubr.f32.mxu0 0.0
      %477 = vmatmul.mubr.f32.gmra.mxu0 %v243
      %v478 = vpop.f32.mrf.mxu0
      %v479 = vadd.f32 %v239, %v478
      %v480 = vpop.f32.mrf.mxu0
      %v481 = vadd.f32 %v239, %v480
      %482 = vdwg.mxu0
      %483 = vmatprep.subr.mxu0 0.0
      %484 = vmatpush1.msra.mxu0 0.0
      %485 = vmatprep.subr.mxu0 0.0
      %486 = vmatpush1.msra.mxu0 0.0
      %487 = vmatprep.subr.mxu0 0.0
      %488 = vmatpush1.msra.mxu0 0.0
      %489 = vmatprep.subr.mxu0 0.0
      %490 = vmatpush1.msra.mxu0 0.0
      %491 = vmatprep.subr.mxu0 0.0
      %492 = vmatpush1.msra.mxu0 0.0
      %493 = vmatprep.subr.mxu0 0.0
      %494 = vmatpush1.msra.mxu0 0.0
      %495 = vmatprep.subr.mxu0 0.0
      %496 = vmatpush1.msra.mxu0 0.0
      %497 = vmatprep.subr.mxu0 0.0
      %498 = vmatpush1.msra.mxu0 0.0
      %499 = vmatprep.subr.mxu0 0.0
      %500 = vmatpush1.msra.mxu0 0.0
      %501 = vmatprep.subr.mxu0 0.0
      %502 = vmatpush1.msra.mxu0 0.0
      %503 = vmatprep.subr.mxu0 0.0
      %504 = vmatpush1.msra.mxu0 0.0
      %505 = vmatprep.subr.mxu0 0.0
      %506 = vmatpush1.msra.mxu0 0.0
      %507 = vmatprep.subr.mxu0 0.0
      %508 = vmatpush1.msra.mxu0 0.0
      %509 = vmatprep.subr.mxu0 %v268
      %510 = vmatpush1.msra.mxu0 %v265
      %511 = vmatprep.subr.mxu0 %v227
      %512 = vmatpush1.msra.mxu0 %v226
      %513 = vmatprep.subr.mxu0 %v219
      %514 = vmatpush1.msra.mxu0 %v218
      %515 = vmatprep.subr.mxu0 0.0
      %516 = vmatpush2.msra.mxu0 0.0
      %517 = vmatprep.subr.mxu0 0.0
      %518 = vmatpush2.msra.mxu0 0.0
      %519 = vmatprep.subr.mxu0 0.0
      %520 = vmatpush2.msra.mxu0 0.0
      %521 = vmatprep.subr.mxu0 0.0
      %522 = vmatpush2.msra.mxu0 0.0
      %523 = vmatprep.subr.mxu0 0.0
      %524 = vmatpush2.msra.mxu0 0.0
      %525 = vmatprep.subr.mxu0 0.0
      %526 = vmatpush2.msra.mxu0 0.0
      %527 = vmatprep.subr.mxu0 0.0
      %528 = vmatpush2.msra.mxu0 0.0
      %529 = vmatprep.subr.mxu0 0.0
      %530 = vmatpush2.msra.mxu0 0.0
      %531 = vmatprep.subr.mxu0 0.0
      %532 = vmatpush2.msra.mxu0 0.0
      %533 = vmatprep.subr.mxu0 0.0
      %534 = vmatpush2.msra.mxu0 0.0
      %535 = vmatprep.subr.mxu0 0.0
      %536 = vmatpush2.msra.mxu0 0.0
      %537 = vmatprep.subr.mxu0 0.0
      %538 = vmatpush2.msra.mxu0 0.0
      %539 = vmatprep.subr.mxu0 0.0
      %540 = vmatpush2.msra.mxu0 0.0
      %541 = vmatprep.subr.mxu0 0.0
      %542 = vmatpush2.msra.mxu0 0.0
      %543 = vmatprep.subr.mxu0 0.0
      %544 = vmatpush2.msra.mxu0 0.0
      %545 = vmatprep.subr.mxu0 0.0
      %546 = vmatpush2.msra.mxu0 0.0
      %547 = vmatprep.mubr.f32.mxu0 0.0
      %548 = vmatmul.mubr.f32.gmra.mxu0 %v243
      %v549 = vpop.f32.mrf.mxu0
      %v550 = vadd.f32 %v239, %v549
      %v551 = vpop.f32.mrf.mxu0
      %v552 = vadd.f32 %v239, %v551
      %553 = vdwg.mxu0
      %vm554 = vcmask 1044480
      %v555 = vsel %vm554, %v337, -inf
      %v556 = vrot.slane %v555, 4
      %v557 = vmax.f32 %v555, %v556
      %v558 = vrot.slane %v557, 2
      %v559 = vmax.f32 %v557, %v558
      %v560 = vrot.slane %v559, 1
      %v561 = vmax.f32 %v559, %v560
      %v562 = vsel %vm554, %v339, -inf
      %v563 = vrot.slane %v562, 4
      %v564 = vmax.f32 %v562, %v563
      %v565 = vrot.slane %v564, 2
      %v566 = vmax.f32 %v564, %v565
      %v567 = vrot.slane %v566, 1
      %v568 = vmax.f32 %v566, %v567
      %v569 = vsel %vm554, %v408, -inf
      %v570 = vrot.slane %v569, 4
      %v571 = vmax.f32 %v569, %v570
      %v572 = vrot.slane %v571, 2
      %v573 = vmax.f32 %v571, %v572
      %v574 = vrot.slane %v573, 1
      %v575 = vmax.f32 %v573, %v574
      %v576 = vsel %vm554, %v410, -inf
      %v577 = vrot.slane %v576, 4
      %v578 = vmax.f32 %v576, %v577
      %v579 = vrot.slane %v578, 2
      %v580 = vmax.f32 %v578, %v579
      %v581 = vrot.slane %v580, 1
      %v582 = vmax.f32 %v580, %v581
      %v583 = vsel %vm554, %v479, -inf
      %v584 = vrot.slane %v583, 4
      %v585 = vmax.f32 %v583, %v584
      %v586 = vrot.slane %v585, 2
      %v587 = vmax.f32 %v585, %v586
      %v588 = vrot.slane %v587, 1
      %v589 = vmax.f32 %v587, %v588
      %v590 = vsel %vm554, %v481, -inf
      %v591 = vrot.slane %v590, 4
      %v592 = vmax.f32 %v590, %v591
      %v593 = vrot.slane %v592, 2
      %v594 = vmax.f32 %v592, %v593
      %v595 = vrot.slane %v594, 1
      %v596 = vmax.f32 %v594, %v595
      %v597 = vsel %vm554, %v550, -inf
      %v598 = vrot.slane %v597, 4
      %v599 = vmax.f32 %v597, %v598
      %v600 = vrot.slane %v599, 2
      %v601 = vmax.f32 %v599, %v600
      %v602 = vrot.slane %v601, 1
      %v603 = vmax.f32 %v601, %v602
      %v604 = vsel %vm554, %v552, -inf
      %v605 = vrot.slane %v604, 4
      %v606 = vmax.f32 %v604, %v605
      %v607 = vrot.slane %v606, 2
      %v608 = vmax.f32 %v606, %v607
      %v609 = vrot.slane %v608, 1
      %v610 = vmax.f32 %v608, %v609
      %v611 = vsub.f32 %v337, %v561
      %v612 = vsub.f32 %v339, %v568
      %v613 = vsub.f32 %v408, %v575
      %v614 = vsub.f32 %v410, %v582
      %v615 = vsub.f32 %v479, %v589
      %v616 = vsub.f32 %v481, %v596
      %v617 = vsub.f32 %v550, %v603
      %v618 = vsub.f32 %v552, %v610
      %v619 = vmul.f32 %v611, 1.442695
      %v620 = vpow.pop %v619
      %v621 = vmul.f32 %v612, 1.442695
      %v622 = vpow.pop %v621
      %v623 = vmul.f32 %v613, 1.442695
      %v624 = vpow.pop %v623
      %v625 = vmul.f32 %v614, 1.442695
      %v626 = vpow.pop %v625
      %v627 = vmul.f32 %v615, 1.442695
      %v628 = vpow.pop %v627
      %v629 = vmul.f32 %v616, 1.442695
      %v630 = vpow.pop %v629
      %v631 = vmul.f32 %v617, 1.442695
      %v632 = vpow.pop %v631
      %v633 = vmul.f32 %v618, 1.442695
      %v634 = vpow.pop %v633
      %v635 = vsel %vm554, %v620, 0.0
      %v636 = vrot.slane %v635, 4
      %v637 = vadd.f32 %v635, %v636
      %v638 = vrot.slane %v637, 2
      %v639 = vadd.f32 %v637, %v638
      %v640 = vrot.slane %v639, 1
      %v641 = vadd.f32 %v639, %v640
      %v642 = vsel %vm554, %v622, 0.0
      %v643 = vrot.slane %v642, 4
      %v644 = vadd.f32 %v642, %v643
      %v645 = vrot.slane %v644, 2
      %v646 = vadd.f32 %v644, %v645
      %v647 = vrot.slane %v646, 1
      %v648 = vadd.f32 %v646, %v647
      %v649 = vsel %vm554, %v624, 0.0
      %v650 = vrot.slane %v649, 4
      %v651 = vadd.f32 %v649, %v650
      %v652 = vrot.slane %v651, 2
      %v653 = vadd.f32 %v651, %v652
      %v654 = vrot.slane %v653, 1
      %v655 = vadd.f32 %v653, %v654
      %v656 = vsel %vm554, %v626, 0.0
      %v657 = vrot.slane %v656, 4
      %v658 = vadd.f32 %v656, %v657
      %v659 = vrot.slane %v658, 2
      %v660 = vadd.f32 %v658, %v659
      %v661 = vrot.slane %v660, 1
      %v662 = vadd.f32 %v660, %v661
      %v663 = vsel %vm554, %v628, 0.0
      %v664 = vrot.slane %v663, 4
      %v665 = vadd.f32 %v663, %v664
      %v666 = vrot.slane %v665, 2
      %v667 = vadd.f32 %v665, %v666
      %v668 = vrot.slane %v667, 1
      %v669 = vadd.f32 %v667, %v668
      %v670 = vsel %vm554, %v630, 0.0
      %v671 = vrot.slane %v670, 4
      %v672 = vadd.f32 %v670, %v671
      %v673 = vrot.slane %v672, 2
      %v674 = vadd.f32 %v672, %v673
      %v675 = vrot.slane %v674, 1
      %v676 = vadd.f32 %v674, %v675
      %v677 = vsel %vm554, %v632, 0.0
      %v678 = vrot.slane %v677, 4
      %v679 = vadd.f32 %v677, %v678
      %v680 = vrot.slane %v679, 2
      %v681 = vadd.f32 %v679, %v680
      %v682 = vrot.slane %v681, 1
      %v683 = vadd.f32 %v681, %v682
      %v684 = vsel %vm554, %v634, 0.0
      %v685 = vrot.slane %v684, 4
      %v686 = vadd.f32 %v684, %v685
      %v687 = vrot.slane %v686, 2
      %v688 = vadd.f32 %v686, %v687
      %v689 = vrot.slane %v688, 1
      %v690 = vadd.f32 %v688, %v689
      %v691 = vrcp.pop %v641
      %v692 = vrcp.pop %v648
      %v693 = vrcp.pop %v655
      %v694 = vrcp.pop %v662
      %v695 = vrcp.pop %v669
      %v696 = vrcp.pop %v676
      %v697 = vrcp.pop %v683
      %v698 = vrcp.pop %v690
      %v699 = vmul.f32 %v620, %v691
      %v700 = vmul.f32 %v622, %v692
      %v701 = vmul.f32 %v624, %v693
      %v702 = vmul.f32 %v626, %v694
      %v703 = vmul.f32 %v628, %v695
      %v704 = vmul.f32 %v630, %v696
      %v705 = vmul.f32 %v632, %v697
      %v706 = vmul.f32 %v634, %v698
      %707 = vst [vmem:[%s208] sm:$0x1f] %v699
      %708 = vst [vmem:[%s208 + $0x8] sm:$0x1f] %v700
      %709 = vst [vmem:[%s208 + $0x10] sm:$0x1f] %v701
      %710 = vst [vmem:[%s208 + $0x18] sm:$0x1f] %v702
      %711 = vst [vmem:[%s208 + $0x20] sm:$0x1f] %v703
      %712 = vst [vmem:[%s208 + $0x28] sm:$0x1f] %v704
      %713 = vst [vmem:[%s208 + $0x30] sm:$0x1f] %v705
      %714 = vst [vmem:[%s208 + $0x38] sm:$0x1f] %v706
      %s715 = smul.u32 8, %s19
      %p716 = scmp.lt.s32.totalorder %s18, 1
      %s717 = scalar_select %p716, %s18, 1
      %p718 = scmp.lt.s32.totalorder %s715, 7
      %s719 = scalar_select %p718, %s715, 7
      %s720 = smul.addr %s717, 8
      %s721 = sadd.s32 %s719, %s720
      %s722 = smul.addr %s721, 8
      %s723 = scalar_lea.vmem %s3, %s722
      // Predicated region
      $region33: #{tpu_custom_call.1} parent=31 // pred_check
        %p724 = pneg %p116
      $region34: #{tpu_custom_call.1} parent=31 // pred_check_branch
        %726 = sbr.rel (%p724) target = $region36
      $region35: #{tpu_custom_call.1} parent=31 // pred_region
        %s727 = smul.u32 8, %s19
      $region36: #{tpu_custom_call.1} parent=31 // pred_fallthru
        _
    $region32: #{tpu_custom_call.1} parent=5 // pred_fallthru
      _
    %p728 = scmp.le.s32.totalorder 2, %s9
    // Predicated region
    $region37: #{tpu_custom_call.1} parent=5 // pred_check
      %p729 = pneg %p728
    $region38: #{tpu_custom_call.1} parent=5 // pred_check_branch
      %731 = sbr.rel (%p729) target = $region40
    $region39: #{tpu_custom_call.1} parent=5 // pred_region
      %s732 = ssub.s32 %s9, 2
      // Predicated region
      $region41: #{tpu_custom_call.1} parent=39 // pred_check
        %p733 = pneg %p122
      $region42: #{tpu_custom_call.1} parent=39 // pred_check_branch
        %735 = sbr.rel (%p733) target = $region44
      $region43: #{tpu_custom_call.1} parent=39 // pred_region
        %s736 = smul.u32 8, %s21
        %p737 = scmp.lt.s32.totalorder %s20, 1
        %s738 = scalar_select %p737, %s20, 1
        %p739 = scmp.lt.s32.totalorder %s736, 7
        %s740 = scalar_select %p739, %s736, 7
        %s741 = smul.addr %s738, 8
        %s742 = sadd.s32 %s740, %s741
        %s743 = smul.addr %s742, 8
        %s744 = scalar_lea.vmem %s3, %s743
      $region44: #{tpu_custom_call.1} parent=39 // pred_fallthru
        _
    $region40: #{tpu_custom_call.1} parent=5 // pred_fallthru
      _
  $region6: #{tpu_custom_call.1} parent=0 // loop_footer
    %s13 = sadd.s32 1, %s9
  $region7: #{tpu_custom_call.1} parent=0 // loop_footer_branch
    %8 = sbr.rel target = $region3
  $region8: #{tpu_custom_call.1} parent=0 // loop_exit
    _

</llo_original>
